<compile_context>
chip_gen: v6e
topology: v6e:2x2x1
jax: 0.10.0
libtpu: 0.0.40
codegen_flags: <defaults>
</compile_context>

<pallas_src>
import functools
import math

import jax
import jax.numpy as jnp
from jax.experimental import pallas as pl
from jax.experimental.pallas import tpu as pltpu

_BN_EPS = 1e-5


# ----------------------------------------------------------------------------
# Kernels
# ----------------------------------------------------------------------------

def _se_branch_kernel(se_ref, w1_ref, b1_ref, w2_ref, b2_ref, o_ref):
    """SE branch, computed once: relu(SE @ W1 + b1) @ W2 + b2 -> [N, D]."""
    h = jnp.maximum(
        jnp.dot(se_ref[...], w1_ref[...], preferred_element_type=jnp.float32)
        + b1_ref[...], 0.0)
    o_ref[...] = (jnp.dot(h, w2_ref[...], preferred_element_type=jnp.float32)
                  + b2_ref[...]).astype(o_ref.dtype)


def _st_add_kernel(se_ref, te_ref, w1_ref, b1_ref, w2_ref, b2_ref, o_ref,
                   *, tm, tn, te_dim):
    """One grid step = TM (batch*time) rows x TN vertices.

      te_emb = FC_te(TE_rows)                    # [TM, D]
      out    = tile(te_emb, N-tile) + se_flat    # [TM, TN*D] lane-dense store
    """
    i = pl.program_id(0)
    start = i * tm
    if tm % 8 == 0:
        start = pl.multiple_of(start, 8)
    te = te_ref[pl.ds(start, tm), :]                          # (TM, TE_dim)

    # Layer 1: tiny TE_dim -> VPU multiply-adds; otherwise MXU matmul.
    if te_dim <= 4:
        h = b1_ref[...]                                       # (1, D) bcast
        for c in range(te_dim):                               # static unroll
            h = h + te[:, c:c + 1] * w1_ref[c:c + 1, :]
    else:
        h = (jnp.dot(te, w1_ref[...], preferred_element_type=jnp.float32)
             + b1_ref[...])
    h = jnp.maximum(h, 0.0)                                   # (TM, D)

    te_emb = (jnp.dot(h, w2_ref[...], preferred_element_type=jnp.float32)
              + b2_ref[...])                                  # (TM, D)

    # Broadcast-add against the precomputed SE slab; single lane-dense store.
    out = jnp.tile(te_emb, (1, tn)) + se_ref[...]             # (TM, TN*D)
    o_ref[...] = out.astype(o_ref.dtype)


# ----------------------------------------------------------------------------
# Hardware query + tiling heuristics
# ----------------------------------------------------------------------------

def _tpu_hw():
    """Best-effort (VMEM capacity, #TensorCores-per-device); safe fallbacks."""
    vmem_cap = 64 << 20            # conservative default (v7x per-TC VMEM)
    num_cores = 1
    try:
        info = pltpu.get_tpu_info()
        vmem_cap = int(getattr(info, "vmem_capacity_bytes", vmem_cap))
    except Exception:
        pass
    try:
        dev = jax.devices()[0]
        num_cores = int(getattr(dev, "num_cores", 1) or 1)
        kind = str(getattr(dev, "device_kind", "")).lower()
        if "v7" in kind or "tpu7" in kind:
            num_cores = max(num_cores, 2)        # v7x: 2 TCs per chip
    except Exception:
        pass
    return vmem_cap, num_cores


def _pick_tiles(bt, n, d, out_itemsize, num_cores,
                block_budget_bytes=4 << 20, max_rows=1024):
    """Choose (TM rows, TN vertices) for the output block (TM, TN*D).

    Output blocks are kept in the 1-4 MiB sweet spot (store-bound kernel);
    the >=2-step row split is applied only on multi-TensorCore parts."""
    # Lane (vertex) tiling: TN divides N, TN*D a multiple of 128 (lane-dense).
    tn = n
    if 8 * n * d * out_itemsize > block_budget_bytes:
        for cand in range(n, 0, -1):
            if n % cand or (cand * d) % 128:
                continue
            if 8 * cand * d * out_itemsize <= block_budget_bytes:
                tn = cand
                break
    n_tiles = n // tn

    # Row tiling.
    if bt < 8:
        return bt, tn                                  # full (tiny) row block
    bt_ceil = ((bt + 7) // 8) * 8
    rows_cap = max(8, block_budget_bytes // (tn * d * out_itemsize))
    rows_cap = min(rows_cap, max_rows, bt_ceil)
    if num_cores >= 2 and n_tiles == 1 and bt >= 16:
        # Split rows across TensorCores only where there are >=2 of them.
        per_core = -(-bt // num_cores)
        rows_cap = min(rows_cap, ((per_core + 7) // 8) * 8)
    rows_cap = max(8, (rows_cap // 8) * 8)

    # Prefer a tile that divides bt exactly (no boundary masking needed).
    for cand in range(rows_cap, 7, -8):
        if bt % cand == 0:
            return cand, tn
    return rows_cap, tn


# ----------------------------------------------------------------------------
# Wrapper
# ----------------------------------------------------------------------------

def st_embedding_forward(SE, TE, params, out_dtype=jnp.float32):
    """SE: [N, SE_dim], TE: [B, T, TE_dim]  ->  [B, T, N, D]."""
    N, SE_dim = SE.shape
    B, T, TE_dim = TE.shape
    D = params["te"][1]["w"].shape[1]
    BT = B * T

    p_se1, p_se2 = params["se"]
    p_te1, p_te2 = params["te"]

    se2d = SE.astype(jnp.float32)
    te2d = TE.reshape(BT, TE_dim).astype(jnp.float32)

    vmem_cap, num_cores = _tpu_hw()
    out_itemsize = jnp.dtype(out_dtype).itemsize
    TM, TN = _pick_tiles(BT, N, D, out_itemsize, num_cores)

    grid_rows = -(-BT // TM)
    grid_cols = N // TN
    BT_pad = grid_rows * TM
    if BT_pad > BT:
        # Tiny pad so the in-kernel pl.ds row slice never reads out of bounds;
        # the output itself stays (BT, ...) with a boundary-masked last block.
        te2d = jnp.pad(te2d, ((0, BT_pad - BT), (0, 0)))

    # ---- SE branch: one tiny Pallas call, grid-invariant result -------------
    se_emb = pl.pallas_call(
        _se_branch_kernel,
        out_shape=jax.ShapeDtypeStruct((N, D), jnp.float32),
    )(se2d, p_se1["w"], p_se1["b"], p_se2["w"], p_se2["b"])
    se_flat = se_emb.reshape(1, N * D)

    # ---- VMEM budget / limit -------------------------------------------------
    out_block_bytes = TM * TN * D * out_itemsize
    needed = (2 * out_block_bytes                       # double-buffered output
              + 2 * 8 * TN * D * 4                      # se_flat (sublane-pad)
              + 2 * BT_pad * 128 * 4                    # TE full block (lane-pad)
              + 2 * (8 * D + D * D + 2 * 8 * D) * 4)    # weights + biases
    vmem_limit = max(2 * needed, 16 << 20)
    vmem_limit = min(vmem_limit, (vmem_cap * 3) // 4)
    vmem_limit = max(vmem_limit, needed + (2 << 20))
    vmem_limit = int(min(vmem_limit, vmem_cap))

    # ---- Main fused TE + broadcast-add kernel --------------------------------
    kernel = functools.partial(_st_add_kernel, tm=TM, tn=TN, te_dim=TE_dim)
    out2d = pl.pallas_call(
        kernel,
        out_shape=jax.ShapeDtypeStruct((BT, N * D), out_dtype),
        grid=(grid_rows, grid_cols),
        in_specs=[
            pl.BlockSpec((1, TN * D), lambda i, j: (0, j)),         # SE slab
            pl.BlockSpec((BT_pad, TE_dim), lambda i, j: (0, 0)),    # TE (full)
            pl.BlockSpec((TE_dim, D), lambda i, j: (0, 0)),         # W1_te
            pl.BlockSpec((1, D), lambda i, j: (0, 0)),              # b1_te
            pl.BlockSpec((D, D), lambda i, j: (0, 0)),              # W2_te
            pl.BlockSpec((1, D), lambda i, j: (0, 0)),              # b2_te
        ],
        out_specs=pl.BlockSpec((TM, TN * D), lambda i, j: (i, j)),
        compiler_params=pltpu.CompilerParams(
            dimension_semantics=("parallel", "parallel"),
            vmem_limit_bytes=vmem_limit),
    )(se_flat, te2d, p_te1["w"], p_te1["b"], p_te2["w"], p_te2["b"])

    return out2d.reshape(B, T, N, D)


# ----------------------------------------------------------------------------
# Parameters (deterministic; BN folded offline)
# ----------------------------------------------------------------------------

def _xavier_uniform(key, cin, cout):
    bound = math.sqrt(6.0 / (cin + cout))
    return jax.random.uniform(key, (cin, cout), jnp.float32, -bound, bound)


def fold_conv_bn(w, b, gamma, beta, running_mean, running_var, eps=_BN_EPS):
    """Fold eval-mode BatchNorm2d into a 1x1-conv (dense) layer.

    For trained PyTorch weights, pass the module's actual running stats and
    affine params here; results then match the eval-mode module exactly."""
    scale = gamma / jnp.sqrt(running_var + eps)
    return dict(w=w * scale[None, :],
                b=((b - running_mean) * scale + beta)[None, :])


def _make_fc_layer(key, cin, cout):
    """conv1x1 (xavier W, zero bias) + default-initialized eval-mode BN."""
    w = _xavier_uniform(key, cin, cout)
    b = jnp.zeros((cout,), jnp.float32)
    gamma = jnp.ones((cout,), jnp.float32)
    beta = jnp.zeros((cout,), jnp.float32)
    mean = jnp.zeros((cout,), jnp.float32)
    var = jnp.ones((cout,), jnp.float32)
    return fold_conv_bn(w, b, gamma, beta, mean, var)


def build_params(key, SE_dim, TE_dim, D):
    ks = jax.random.split(key, 4)
    return dict(
        se=[_make_fc_layer(ks[0], SE_dim, D), _make_fc_layer(ks[1], D, D)],
        te=[_make_fc_layer(ks[2], TE_dim, D), _make_fc_layer(ks[3], D, D)],
    )


# ----------------------------------------------------------------------------
# Pure-JAX reference (for correctness check)
# ----------------------------------------------------------------------------

def st_embedding_reference(SE, TE, params):
    def fc(x, layers, acts):
        for layer, act in zip(layers, acts):
            x = x @ layer["w"] + layer["b"]
            if act:
                x = jnp.maximum(x, 0.0)
        return x
    se = fc(SE[None, None, :, :].astype(jnp.float32),
            params["se"], (True, False))                       # [1,1,N,D]
    te = fc(TE[:, :, None, :].astype(jnp.float32),
            params["te"], (True, False))                       # [B,T,1,D]
    return se + te                                             # [B,T,N,D]


# ----------------------------------------------------------------------------
# Main
# ----------------------------------------------------------------------------

if __name__ == "__main__":
    N, SE_dim, TE_dim, D = 8, 16, 2, 128
    B, num_his, num_pred = 4, 8, 8
    T = num_his + num_pred

    key = jax.random.PRNGKey(0)
    kp, kse, kte = jax.random.split(key, 3)

    params = build_params(kp, SE_dim, TE_dim, D)
    SE = jax.random.normal(kse, (N, SE_dim), jnp.float32)
    TE = jax.random.normal(kte, (B, T, TE_dim), jnp.float32)

    out = st_embedding_forward(SE, TE, params)
    out = jax.block_until_ready(out)
    assert out.shape == (B, T, N, D), out.shape
    assert bool(jnp.all(jnp.isfinite(out)))

    ref = st_embedding_reference(SE, TE, params)
    max_err = float(jnp.max(jnp.abs(out - ref)))
    assert max_err < 1e-3, f"mismatch vs reference: {max_err}"

    print("KERNEL_OK")
</pallas_src>

<mosaic_0001>
module attributes {stable_mosaic.version = 11 : i64} {
  func.func @_se_branch_kernel(%arg0: memref<8x16xf32, #tpu.memory_space<vmem>>, %arg1: memref<16x128xf32, #tpu.memory_space<vmem>>, %arg2: memref<1x128xf32, #tpu.memory_space<vmem>>, %arg3: memref<128x128xf32, #tpu.memory_space<vmem>>, %arg4: memref<1x128xf32, #tpu.memory_space<vmem>>, %arg5: memref<8x128xf32, #tpu.memory_space<vmem>>) attributes {dimension_semantics = [], scalar_prefetch = 0 : i64, scratch_operands = 0 : i64, tpu.core_type = #tpu.core_type<tc>} {
    %c0 = arith.constant 0 : index
    %c0_0 = arith.constant 0 : index
    %0 = vector.load %arg0[%c0, %c0_0] : memref<8x16xf32, #tpu.memory_space<vmem>>, vector<8x16xf32>
    %c0_1 = arith.constant 0 : index
    %c0_2 = arith.constant 0 : index
    %1 = vector.load %arg1[%c0_1, %c0_2] : memref<16x128xf32, #tpu.memory_space<vmem>>, vector<16x128xf32>
    %cst = arith.constant dense<0.000000e+00> : vector<8x128xf32>
    %2 = tpu.matmul %0, %1, %cst {dimension_numbers = #tpu.dot_dimension_numbers<[1], [0], [0], [1], [0, 0, 1, 1], [], []>} : vector<8x16xf32>, vector<16x128xf32>, vector<8x128xf32> -> vector<8x128xf32>
    %c0_3 = arith.constant 0 : index
    %c0_4 = arith.constant 0 : index
    %3 = vector.load %arg2[%c0_3, %c0_4] : memref<1x128xf32, #tpu.memory_space<vmem>>, vector<1x128xf32>
    %4 = vector.broadcast %3 : vector<1x128xf32> to vector<8x128xf32>
    %5 = arith.addf %2, %4 : vector<8x128xf32>
    %cst_5 = arith.constant 0.000000e+00 : f32
    %6 = vector.broadcast %cst_5 : f32 to vector<8x128xf32>
    %7 = arith.maximumf %5, %6 : vector<8x128xf32>
    %c0_6 = arith.constant 0 : index
    %c0_7 = arith.constant 0 : index
    %8 = vector.load %arg3[%c0_6, %c0_7] : memref<128x128xf32, #tpu.memory_space<vmem>>, vector<128x128xf32>
    %cst_8 = arith.constant dense<0.000000e+00> : vector<8x128xf32>
    %9 = tpu.matmul %7, %8, %cst_8 {dimension_numbers = #tpu.dot_dimension_numbers<[1], [0], [0], [1], [0, 0, 1, 1], [], []>} : vector<8x128xf32>, vector<128x128xf32>, vector<8x128xf32> -> vector<8x128xf32>
    %c0_9 = arith.constant 0 : index
    %c0_10 = arith.constant 0 : index
    %10 = vector.load %arg4[%c0_9, %c0_10] : memref<1x128xf32, #tpu.memory_space<vmem>>, vector<1x128xf32>
    %11 = vector.broadcast %10 : vector<1x128xf32> to vector<8x128xf32>
    %12 = arith.addf %9, %11 : vector<8x128xf32>
    %c0_11 = arith.constant 0 : index
    %c0_12 = arith.constant 0 : index
    %13 = vector.load %arg5[%c0_11, %c0_12] : memref<8x128xf32, #tpu.memory_space<vmem>>, vector<8x128xf32>
    tpu.vector_store %arg5[%c0_11, %c0_12], %12 {strides = array<i32>} : memref<8x128xf32, #tpu.memory_space<vmem>>, vector<8x128xf32>,
    return
  }
}

</mosaic_0001>

<llo_original>
// kernel: tpu_custom_call.1
$region0: #{tpu_custom_call.1}
  #allocation0 [shape = 'u32[]', space=smem, size = 0x4, offset = 0x4, fixed_abs, tag = 'smem constant byte address 0x4 - core index']
  #allocation1 [shape = 'u32[144,128]{1,0:T(1,128)}', space=vmem, size = 0x12000, scoped, tag = 'internal scratch']
  %s0 = inlined_call_operand.hbm [shape: f32[8,16], index: 0, kind: input, shape index: {}]
  %s1 = inlined_call_operand.hbm [shape: f32[16,128], index: 1, kind: input, shape index: {}]
  %s2 = inlined_call_operand.vmem [shape: f32[1,128], index: 2, kind: input, shape index: {}]
  %s3 = inlined_call_operand.hbm [shape: f32[128,128], index: 3, kind: input, shape index: {}]
  %s4 = inlined_call_operand.vmem [shape: f32[1,128], index: 4, kind: input, shape index: {}]
  %s5 = inlined_call_operand.hbm [shape: f32[8,128], index: 5, kind: output, shape index: {}]
  %s6 = sld [smem:[#allocation0]]
  $region42: #{tpu_custom_call.1} parent=0
    _
  %s8 = ssub.s32 1, %s6
  %s9 = scalar_select 0, %s8, %s6
  $region1: #{tpu_custom_call.1} parent=0
    #allocation2 [shape = 'u8[4096]{0}', space=vmem, size = 0x1000, scoped, tag = 'input window, operand 0, single buffered']
    #allocation3 [shape = 's32[1]{0}', space=sflag, size = 0x4, scoped, tag = 'scoped memory for tpu_custom_call.1']
    #allocation4 [shape = 's32[1]{0}', space=sflag, size = 0x4, scoped, tag = 'scoped memory for tpu_custom_call.1']
    #allocation5 [shape = 'u8[8192]{0}', space=vmem, size = 0x2000, scoped, tag = 'input window, operand 1, single buffered']
    #allocation6 [shape = 's32[1]{0}', space=sflag, size = 0x4, scoped, tag = 'scoped memory for tpu_custom_call.1']
    #allocation7 [shape = 'u8[65536]{0}', space=vmem, size = 0x10000, scoped, tag = 'input window, operand 3, single buffered']
    #allocation8 [shape = 'u8[4096]{0}', space=vmem, size = 0x1000, scoped, tag = 'output window, operand 0, single buffered']
    %10 = vsyncpa [#allocation3], 0
    %11 = vsyncpa [#allocation6], 0
    %12 = vsyncpa [#allocation4], 0
    // Predicated region
    $region2: #{tpu_custom_call.1} parent=1 // pred_check
      _
    $region3: #{tpu_custom_call.1} parent=1 // pred_check_branch
      %14 = sbr.rel (0) target = $region5
    $region4: #{tpu_custom_call.1} parent=1 // pred_region
      %s16 = ssub.s32 128, 128
      %17 = vsyncadd [#allocation3], %s16
      %s19 = sshll.u32 [#allocation2], 4
      %s20 = int_to_ptr.vmem [resolvable:$true] %s19
      %22 = dma.hbm_to_vmem [thread:$0]  %s0, 128, %s20, [#allocation3]
    $region5: #{tpu_custom_call.1} parent=1 // pred_fallthru
      _
    // Predicated region
    $region6: #{tpu_custom_call.1} parent=1 // pred_check
      _
    $region7: #{tpu_custom_call.1} parent=1 // pred_check_branch
      %24 = sbr.rel (0) target = $region9
    $region8: #{tpu_custom_call.1} parent=1 // pred_region
      %s26 = ssub.s32 256, 256
      %27 = vsyncadd [#allocation6], %s26
      %s28 = sshll.u32 [#allocation5], 4
      %s29 = int_to_ptr.vmem [resolvable:$true] %s28
      %34 = dma.hbm_to_vmem [thread:$0]  %s1, 256, %s29, [#allocation6], 128, 128, 8
    $region9: #{tpu_custom_call.1} parent=1 // pred_fallthru
      _
    // Predicated region
    $region10: #{tpu_custom_call.1} parent=1 // pred_check
      _
    $region11: #{tpu_custom_call.1} parent=1 // pred_check_branch
      %36 = sbr.rel (0) target = $region13
    $region12: #{tpu_custom_call.1} parent=1 // pred_region
      _
    $region13: #{tpu_custom_call.1} parent=1 // pred_fallthru
      _
    // Predicated region
    $region14: #{tpu_custom_call.1} parent=1 // pred_check
      _
    $region15: #{tpu_custom_call.1} parent=1 // pred_check_branch
      %38 = sbr.rel (0) target = $region17
    $region16: #{tpu_custom_call.1} parent=1 // pred_region
      %s40 = ssub.s32 2048, 2048
      %41 = vsyncadd [#allocation6], %s40
      %s42 = sshll.u32 [#allocation7], 4
      %s43 = int_to_ptr.vmem [resolvable:$true] %s42
      %48 = dma.hbm_to_vmem [thread:$0]  %s3, 2048, %s43, [#allocation6], 128, 128, 8
    $region17: #{tpu_custom_call.1} parent=1 // pred_fallthru
      _
    // Predicated region
    $region18: #{tpu_custom_call.1} parent=1 // pred_check
      _
    $region19: #{tpu_custom_call.1} parent=1 // pred_check_branch
      %50 = sbr.rel (0) target = $region21
    $region20: #{tpu_custom_call.1} parent=1 // pred_region
      _
    $region21: #{tpu_custom_call.1} parent=1 // pred_fallthru
      _
    // Predicated region
    $region22: #{tpu_custom_call.1} parent=1 // pred_check
      _
    $region23: #{tpu_custom_call.1} parent=1 // pred_check_branch
      %52 = sbr.rel (0) target = $region25
    $region24: #{tpu_custom_call.1} parent=1 // pred_region
      %53 = dma.done [#allocation3], 128
    $region25: #{tpu_custom_call.1} parent=1 // pred_fallthru
      _
    // Predicated region
    $region26: #{tpu_custom_call.1} parent=1 // pred_check
      _
    $region27: #{tpu_custom_call.1} parent=1 // pred_check_branch
      %55 = sbr.rel (0) target = $region29
    $region28: #{tpu_custom_call.1} parent=1 // pred_region
      %56 = dma.done [#allocation6], 256
    $region29: #{tpu_custom_call.1} parent=1 // pred_fallthru
      _
    // Predicated region
    $region30: #{tpu_custom_call.1} parent=1 // pred_check
      _
    $region31: #{tpu_custom_call.1} parent=1 // pred_check_branch
      %58 = sbr.rel (0) target = $region33
    $region32: #{tpu_custom_call.1} parent=1 // pred_region
      %59 = dma.done [#allocation6], 2048
    $region33: #{tpu_custom_call.1} parent=1 // pred_fallthru
      _
    %v60 = vld [vmem:[#allocation2] sm:$0xff]
    %v61 = vld [vmem:[#allocation5] sm:$0xff]
    %v62 = vld [vmem:[#allocation5 + $0x8] sm:$0xff]
    %v63 = vld [vmem:[%s2] sm:$0x1]
    %v65 = vlaneseq
    %v66 = vshrl.u32 %v65, 7
    %v67 = vsub.s32 0, %v66
    %v68 = vrot.slane %v63, %v67
    %vm70 = vcmask 130048
    %v72 = vsel %vm70, %v60, 0
    %74 = vmatprep.subr.mxu0 0.0
    %75 = vmatpush1.msra.mxu0 0.0
    %76 = vmatprep.subr.mxu0 0.0
    %77 = vmatpush1.msra.mxu0 0.0
    %78 = vmatprep.subr.mxu0 0.0
    %79 = vmatpush1.msra.mxu0 0.0
    %80 = vmatprep.subr.mxu0 0.0
    %81 = vmatpush1.msra.mxu0 0.0
    %82 = vmatprep.subr.mxu0 0.0
    %83 = vmatpush1.msra.mxu0 0.0
    %84 = vmatprep.subr.mxu0 0.0
    %85 = vmatpush1.msra.mxu0 0.0
    %86 = vmatprep.subr.mxu0 0.0
    %87 = vmatpush1.msra.mxu0 0.0
    %88 = vmatprep.subr.mxu0 0.0
    %89 = vmatpush1.msra.mxu0 0.0
    %90 = vmatprep.subr.mxu0 0.0
    %91 = vmatpush1.msra.mxu0 0.0
    %92 = vmatprep.subr.mxu0 0.0
    %93 = vmatpush1.msra.mxu0 0.0
    %94 = vmatprep.subr.mxu0 0.0
    %95 = vmatpush1.msra.mxu0 0.0
    %96 = vmatprep.subr.mxu0 0.0
    %97 = vmatpush1.msra.mxu0 0.0
    %98 = vmatprep.subr.mxu0 0.0
    %99 = vmatpush1.msra.mxu0 0.0
    %100 = vmatprep.subr.mxu0 0.0
    %101 = vmatpush1.msra.mxu0 0.0
    %102 = vmatprep.subr.mxu0 0.0
    %103 = vmatpush1.msra.mxu0 %v62
    %104 = vmatprep.subr.mxu0 0.0
    %105 = vmatpush1.msra.mxu0 %v61
    %106 = vmatprep.subr.mxu0 0.0
    %107 = vmatpush2.msra.mxu0 0.0
    %108 = vmatprep.subr.mxu0 0.0
    %109 = vmatpush2.msra.mxu0 0.0
    %110 = vmatprep.subr.mxu0 0.0
    %111 = vmatpush2.msra.mxu0 0.0
    %112 = vmatprep.subr.mxu0 0.0
    %113 = vmatpush2.msra.mxu0 0.0
    %114 = vmatprep.subr.mxu0 0.0
    %115 = vmatpush2.msra.mxu0 0.0
    %116 = vmatprep.subr.mxu0 0.0
    %117 = vmatpush2.msra.mxu0 0.0
    %118 = vmatprep.subr.mxu0 0.0
    %119 = vmatpush2.msra.mxu0 0.0
    %120 = vmatprep.subr.mxu0 0.0
    %121 = vmatpush2.msra.mxu0 0.0
    %122 = vmatprep.subr.mxu0 0.0
    %123 = vmatpush2.msra.mxu0 0.0
    %124 = vmatprep.subr.mxu0 0.0
    %125 = vmatpush2.msra.mxu0 0.0
    %126 = vmatprep.subr.mxu0 0.0
    %127 = vmatpush2.msra.mxu0 0.0
    %128 = vmatprep.subr.mxu0 0.0
    %129 = vmatpush2.msra.mxu0 0.0
    %130 = vmatprep.subr.mxu0 0.0
    %131 = vmatpush2.msra.mxu0 0.0
    %132 = vmatprep.subr.mxu0 0.0
    %133 = vmatpush2.msra.mxu0 0.0
    %134 = vmatprep.subr.mxu0 0.0
    %135 = vmatpush2.msra.mxu0 0.0
    %136 = vmatprep.subr.mxu0 0.0
    %137 = vmatpush2.msra.mxu0 0.0
    %138 = vmatprep.mubr.f32.mxu0 0.0
    %139 = vmatmul.mubr.f32.gmra.mxu0 %v72
    %v140 = vpop.f32.mrf.mxu0
    %v141 = vadd.f32 %v68, %v140
    %v142 = vpop.f32.mrf.mxu0
    %143 = vdwg.mxu0
    %v144 = vmax.f32 %v141, 0.0
    %v145 = vld [vmem:[#allocation7] sm:$0xff]
    %v146 = vld [vmem:[#allocation7 + $0x8] sm:$0xff]
    %v147 = vld [vmem:[#allocation7 + $0x10] sm:$0xff]
    %v148 = vld [vmem:[#allocation7 + $0x18] sm:$0xff]
    %v149 = vld [vmem:[#allocation7 + $0x20] sm:$0xff]
    %v150 = vld [vmem:[#allocation7 + $0x28] sm:$0xff]
    %v151 = vld [vmem:[#allocation7 + $0x30] sm:$0xff]
    %v152 = vld [vmem:[#allocation7 + $0x38] sm:$0xff]
    %v153 = vld [vmem:[#allocation7 + $0x40] sm:$0xff]
    %v154 = vld [vmem:[#allocation7 + $0x48] sm:$0xff]
    %v155 = vld [vmem:[#allocation7 + $0x50] sm:$0xff]
    %v156 = vld [vmem:[#allocation7 + $0x58] sm:$0xff]
    %v157 = vld [vmem:[#allocation7 + $0x60] sm:$0xff]
    %v158 = vld [vmem:[#allocation7 + $0x68] sm:$0xff]
    %v159 = vld [vmem:[#allocation7 + $0x70] sm:$0xff]
    %v160 = vld [vmem:[#allocation7 + $0x78] sm:$0xff]
    %v161 = vld [vmem:[%s4] sm:$0x1]
    %v163 = vlaneseq
    %v164 = vshrl.u32 %v163, 7
    %v165 = vsub.s32 0, %v164
    %v166 = vrot.slane %v161, %v165
    %168 = vmatprep.subr.mxu0 0.0
    %169 = vmatpush1.msra.mxu0 %v160
    %170 = vmatprep.subr.mxu0 0.0
    %171 = vmatpush1.msra.mxu0 %v159
    %172 = vmatprep.subr.mxu0 0.0
    %173 = vmatpush1.msra.mxu0 %v158
    %174 = vmatprep.subr.mxu0 0.0
    %175 = vmatpush1.msra.mxu0 %v157
    %176 = vmatprep.subr.mxu0 0.0
    %177 = vmatpush1.msra.mxu0 %v156
    %178 = vmatprep.subr.mxu0 0.0
    %179 = vmatpush1.msra.mxu0 %v155
    %180 = vmatprep.subr.mxu0 0.0
    %181 = vmatpush1.msra.mxu0 %v154
    %182 = vmatprep.subr.mxu0 0.0
    %183 = vmatpush1.msra.mxu0 %v153
    %184 = vmatprep.subr.mxu0 0.0
    %185 = vmatpush1.msra.mxu0 %v152
    %186 = vmatprep.subr.mxu0 0.0
    %187 = vmatpush1.msra.mxu0 %v151
    %188 = vmatprep.subr.mxu0 0.0
    %189 = vmatpush1.msra.mxu0 %v150
    %190 = vmatprep.subr.mxu0 0.0
    %191 = vmatpush1.msra.mxu0 %v149
    %192 = vmatprep.subr.mxu0 0.0
    %193 = vmatpush1.msra.mxu0 %v148
    %194 = vmatprep.subr.mxu0 0.0
    %195 = vmatpush1.msra.mxu0 %v147
    %196 = vmatprep.subr.mxu0 0.0
    %197 = vmatpush1.msra.mxu0 %v146
    %198 = vmatprep.subr.mxu0 0.0
    %199 = vmatpush1.msra.mxu0 %v145
    %200 = vmatprep.subr.mxu0 0.0
    %201 = vmatpush2.msra.mxu0 0.0
    %202 = vmatprep.subr.mxu0 0.0
    %203 = vmatpush2.msra.mxu0 0.0
    %204 = vmatprep.subr.mxu0 0.0
    %205 = vmatpush2.msra.mxu0 0.0
    %206 = vmatprep.subr.mxu0 0.0
    %207 = vmatpush2.msra.mxu0 0.0
    %208 = vmatprep.subr.mxu0 0.0
    %209 = vmatpush2.msra.mxu0 0.0
    %210 = vmatprep.subr.mxu0 0.0
    %211 = vmatpush2.msra.mxu0 0.0
    %212 = vmatprep.subr.mxu0 0.0
    %213 = vmatpush2.msra.mxu0 0.0
    %214 = vmatprep.subr.mxu0 0.0
    %215 = vmatpush2.msra.mxu0 0.0
    %216 = vmatprep.subr.mxu0 0.0
    %217 = vmatpush2.msra.mxu0 0.0
    %218 = vmatprep.subr.mxu0 0.0
    %219 = vmatpush2.msra.mxu0 0.0
    %220 = vmatprep.subr.mxu0 0.0
    %221 = vmatpush2.msra.mxu0 0.0
    %222 = vmatprep.subr.mxu0 0.0
    %223 = vmatpush2.msra.mxu0 0.0
    %224 = vmatprep.subr.mxu0 0.0
    %225 = vmatpush2.msra.mxu0 0.0
    %226 = vmatprep.subr.mxu0 0.0
    %227 = vmatpush2.msra.mxu0 0.0
    %228 = vmatprep.subr.mxu0 0.0
    %229 = vmatpush2.msra.mxu0 0.0
    %230 = vmatprep.subr.mxu0 0.0
    %231 = vmatpush2.msra.mxu0 0.0
    %232 = vmatprep.mubr.f32.mxu0 0.0
    %233 = vmatmul.mubr.f32.gmra.mxu0 %v144
    %v234 = vpop.f32.mrf.mxu0
    %v235 = vadd.f32 %v166, %v234
    %v236 = vpop.f32.mrf.mxu0
    %237 = vdwg.mxu0
    %238 = vst [vmem:[#allocation8] sm:$0xff] %v235
    // Predicated region
    $region34: #{tpu_custom_call.1} parent=1 // pred_check
      _
    $region35: #{tpu_custom_call.1} parent=1 // pred_check_branch
      %240 = sbr.rel (0) target = $region37
    $region36: #{tpu_custom_call.1} parent=1 // pred_region
      %s242 = ssub.s32 128, 128
      %243 = vsyncadd [#allocation4], %s242
      %s245 = sshll.u32 [#allocation8], 4
      %s246 = int_to_ptr.vmem [resolvable:$true] %s245
      %248 = dma.vmem_to_hbm [thread:$0]  %s246, 128, %s5, [#allocation4]
    $region37: #{tpu_custom_call.1} parent=1 // pred_fallthru
      _
    // Predicated region
    $region38: #{tpu_custom_call.1} parent=1 // pred_check
      _
    $region39: #{tpu_custom_call.1} parent=1 // pred_check_branch
      %250 = sbr.rel (0) target = $region41
    $region40: #{tpu_custom_call.1} parent=1 // pred_region
      %251 = dma.done [#allocation4], 128
    $region41: #{tpu_custom_call.1} parent=1 // pred_fallthru
      _
    %252 = vsyncpa [#allocation3], 1
    %253 = vsyncpa [#allocation6], 1
    %254 = vsyncpa [#allocation4], 1

</llo_original>
